<compile_context>
chip_gen: v7x
topology: tpu7x:2x2x1
jax: 0.10.0
libtpu: 0.0.40
codegen_flags: <defaults>
</compile_context>

<pallas_src>
import functools

import jax
import jax.numpy as jnp
from jax.experimental import pallas as pl
from jax.experimental.pallas import tpu as pltpu

LANE = 128
_MIB = 1024 * 1024


def _sublane_multiple(dtype):
    """Required second-to-last block-dim multiple for a given dtype."""
    return {4: 8, 2: 16, 1: 32}.get(jnp.dtype(dtype).itemsize, 8)


def _vmem_capacity_bytes():
    """Physical VMEM per core (128 MiB v5e/v6e, 64 MiB v7x); safe fallback."""
    try:
        return int(pltpu.get_tpu_info().vmem_capacity_bytes)
    except Exception:
        return 64 * _MIB  # conservative (v7x)


# -----------------------------------------------------------------------------
# Pallas kernel: seq-sum accumulated over seq tiles, then mean + linear
# -----------------------------------------------------------------------------
def _cdn_head_kernel(last_ref, first_ref, w_ref, b_ref, out_ref, acc_ref, *,
                     inv_seq_len):
    # last_ref / first_ref : (tB, tS, H)   bf16 (or input dtype)
    # w_ref                : (H, Lp)       resident across the seq axis
    # b_ref                : (1, Lp)
    # out_ref              : (tB, Lp)      f32, lane-dense
    # acc_ref              : (tB, H)       f32 VMEM scratch (running seq-sum)
    s = pl.program_id(1)

    @pl.when(s == 0)
    def _():
        acc_ref[...] = jnp.zeros_like(acc_ref)

    # Reduce each input separately straight into f32: avoids keeping the full
    # (tB, tS, H) summed intermediate live (lower vreg pressure), and keeps
    # the reduction numerically f32 even with bf16 activations.
    acc_ref[...] += (jnp.sum(last_ref[...], axis=1, dtype=jnp.float32) +
                     jnp.sum(first_ref[...], axis=1, dtype=jnp.float32))

    @pl.when(s == pl.num_programs(1) - 1)
    def _():
        # Fold the mean into a single scalar multiply on the small accumulator.
        avg = acc_ref[...] * inv_seq_len                       # (tB, H) f32
        # Dropout: nn.Dropout in eval mode is the identity -> no-op.
        logits = jnp.dot(avg, w_ref[...],
                         preferred_element_type=jnp.float32)   # (tB, Lp)
        out_ref[...] = (logits + b_ref[...]).astype(out_ref.dtype)


def prepare_head_params(cls_w, cls_b):
    """Pad classifier weight/bias to a lane-dense label dim. Done ONCE."""
    H, L = cls_w.shape
    Lp = ((L + LANE - 1) // LANE) * LANE
    w_p = jnp.pad(cls_w, ((0, 0), (0, Lp - L)))
    b_p = jnp.pad(cls_b.reshape(1, L), ((0, 0), (0, Lp - L)))
    return w_p, b_p, L


def cdn_head(last_hidden, first_hidden, w_padded, b_padded, num_labels, *,
             block_b=None, block_s=None, vmem_limit_bytes=None):
    """mean(last+first, axis=1) @ W + b as a tiled, HBM-streaming Pallas kernel."""
    B, S, H = last_hidden.shape
    assert first_hidden.shape == last_hidden.shape
    assert first_hidden.dtype == last_hidden.dtype
    Hw, Lp = w_padded.shape
    assert Hw == H and Lp % LANE == 0 and num_labels <= Lp

    in_dtype = last_hidden.dtype
    itemsize = jnp.dtype(in_dtype).itemsize
    sub = _sublane_multiple(in_dtype)

    # ---- per-generation VMEM budget ----------------------------------------
    if vmem_limit_bytes is None:
        cap = _vmem_capacity_bytes()
        # ~48 MiB on v7x (64 MiB phys), ~96-100 MiB on v5e/v6e (128 MiB phys).
        vmem_limit_bytes = min(cap * 3 // 4, 100 * _MIB)

    # ---- batch tile: give v7x's 2 TCs >=2 batch tiles when legal -----------
    if block_b is None:
        block_b = B
        if B >= 16 and B % 8 == 0:
            cand = (B // 2) - ((B // 2) % 8)
            while cand >= 8 and B % cand != 0:
                cand -= 8
            if cand >= 8 and B % cand == 0:
                block_b = cand
    assert B % block_b == 0, "block_b must divide batch"
    assert block_b == B or block_b % 8 == 0, (
        "block_b must equal B or be a multiple of 8 (output/scratch sublane rule)")

    # ---- seq tile: largest aligned divisor of S fitting the input budget ---
    if block_s is None:
        w_itemsize = jnp.dtype(w_padded.dtype).itemsize
        weight_bytes = (H * Lp + Lp) * w_itemsize * 2          # assume 2 buffers
        misc_bytes = block_b * Lp * 4 * 2 + block_b * H * 4 + 2 * _MIB
        input_budget = max(vmem_limit_bytes - weight_bytes - misc_bytes, 2 * _MIB)
        cands = sorted({S} | {d for d in range(sub, S, sub) if S % d == 0},
                       reverse=True)
        block_s = cands[-1]
        for bs in cands:
            if 4 * block_b * bs * H * itemsize <= input_budget:  # 2 in x 2 buf
                block_s = bs
                break
    assert S % block_s == 0, "block_s must divide seq len"
    assert block_s == S or block_s % sub == 0, (
        f"seq tile must be a multiple of {sub} for dtype {in_dtype} (or == S)")

    kernel = functools.partial(_cdn_head_kernel, inv_seq_len=1.0 / S)

    def weight_specs(single_buffer):
        if single_buffer:
            try:
                # Constant index_map over the whole grid -> one buffer suffices.
                return [pl.BlockSpec((H, Lp), lambda b, s: (0, 0),
                                     pipeline_mode=pl.Buffered(1)),
                        pl.BlockSpec((1, Lp), lambda b, s: (0, 0),
                                     pipeline_mode=pl.Buffered(1))]
            except TypeError:
                pass
        return [pl.BlockSpec((H, Lp), lambda b, s: (0, 0)),
                pl.BlockSpec((1, Lp), lambda b, s: (0, 0))]

    def run(single_buffer_weights):
        return pl.pallas_call(
            kernel,
            out_shape=jax.ShapeDtypeStruct((B, Lp), jnp.float32),
            grid_spec=pltpu.PrefetchScalarGridSpec(
                num_scalar_prefetch=0,
                grid=(B // block_b, S // block_s),
                in_specs=[
                    pl.BlockSpec((block_b, block_s, H), lambda b, s: (b, s, 0)),
                    pl.BlockSpec((block_b, block_s, H), lambda b, s: (b, s, 0)),
                    *weight_specs(single_buffer_weights),
                ],
                out_specs=pl.BlockSpec((block_b, Lp), lambda b, s: (b, 0)),
                scratch_shapes=[pltpu.VMEM((block_b, H), jnp.float32)],
            ),
            compiler_params=pltpu.CompilerParams(
                # batch axis shards across TCs (v7x megacore); seq is a reduction.
                dimension_semantics=("parallel", "arbitrary"),
                vmem_limit_bytes=int(vmem_limit_bytes)),
        )(last_hidden, first_hidden, w_padded, b_padded)

    try:
        out = run(True)           # single-buffered resident weight/bias
    except Exception:
        out = run(False)          # fall back to default double buffering
    return out[:, :num_labels]


# -----------------------------------------------------------------------------
# Synthetic encoder stand-in (plain JAX glue).
# Produces outputs[0] (last hidden states) and outputs[2][0] (embedding output
# == first hidden states) of a BERT-like encoder.
# TODO(synk): the real pretrained HF encoder has no clean Pallas equivalent;
# it is replaced by a deterministic embedding + single dense tanh layer.
# -----------------------------------------------------------------------------
def synthetic_encoder(params, input_ids, token_type_ids):
    B, S = input_ids.shape
    word = params["word_emb"][input_ids]                 # (B, S, H)
    pos = params["pos_emb"][:S][None, :, :]              # (1, S, H)
    ttype = params["type_emb"][token_type_ids]           # (B, S, H)
    first_hidden = word + pos + ttype                    # embedding output
    last_hidden = jnp.tanh(
        jnp.einsum("bsh,hk->bsk", first_hidden, params["enc_w"]) + params["enc_b"])
    return last_hidden, first_hidden


def init_params(hidden=32, num_labels=16, vocab=100, max_seq=32, n_types=2):
    key = jax.random.PRNGKey(0)
    ks = jax.random.split(key, 6)
    cls_w = 0.1 * jax.random.normal(ks[4], (hidden, num_labels), jnp.float32)
    cls_b = 0.01 * jax.random.normal(ks[5], (num_labels,), jnp.float32)
    w_p, b_p, _ = prepare_head_params(cls_w, cls_b)      # pad once, not per call
    return {
        "word_emb": 0.02 * jax.random.normal(ks[0], (vocab, hidden), jnp.float32),
        "pos_emb": 0.02 * jax.random.normal(ks[1], (max_seq, hidden), jnp.float32),
        "type_emb": 0.02 * jax.random.normal(ks[2], (n_types, hidden), jnp.float32),
        "enc_w": 0.1 * jax.random.normal(ks[3], (hidden, hidden), jnp.float32),
        "enc_b": jnp.zeros((hidden,), jnp.float32),
        # classifier = nn.Linear(hidden_size, num_labels); stored as (H, L)
        "cls_w": cls_w,
        "cls_b": cls_b,
        "cls_w_p": w_p,
        "cls_b_p": b_p,
        "num_labels": num_labels,
    }


def cdn_for_cls_forward(params, input_ids, token_type_ids, labels=None,
                        block_b=None, block_s=None, head_dtype=jnp.bfloat16):
    last_hidden, first_hidden = synthetic_encoder(params, input_ids, token_type_ids)
    # The head is HBM-bandwidth bound: stream activations as bf16; the kernel
    # accumulates the sequence sum in f32 so numerics are preserved.
    logits = cdn_head(last_hidden.astype(head_dtype),
                      first_hidden.astype(head_dtype),
                      params["cls_w_p"], params["cls_b_p"], params["num_labels"],
                      block_b=block_b, block_s=block_s)
    if labels is not None:
        logp = jax.nn.log_softmax(logits, axis=-1)
        loss = -jnp.mean(jnp.take_along_axis(logp, labels[:, None], axis=-1))
        return loss, logits
    return logits


if __name__ == "__main__":
    # Small demo shapes. S=32 with block_s=16 exercises the 2-step seq
    # accumulation with a bf16-legal (16-aligned) seq tile; block_b defaults
    # to B (=2 < 16) which keeps the (block_b, Lp) output block legal.
    B, S, H, L = 2, 32, 32, 16
    params = init_params(hidden=H, num_labels=L, vocab=100, max_seq=S)

    key = jax.random.PRNGKey(0)
    k1, k2 = jax.random.split(key)
    input_ids = jax.random.randint(k1, (B, S), 0, 100, dtype=jnp.int32)
    token_type_ids = jax.random.randint(k2, (B, S), 0, 2, dtype=jnp.int32)

    logits = cdn_for_cls_forward(params, input_ids, token_type_ids, block_s=16)
    logits = jax.block_until_ready(logits)

    # Reference check (pure JAX) of the Pallas head, using the same bf16
    # activations the kernel sees, reduced/matmul'ed in f32.
    last_hidden, first_hidden = synthetic_encoder(params, input_ids, token_type_ids)
    last_b = last_hidden.astype(jnp.bfloat16).astype(jnp.float32)
    first_b = first_hidden.astype(jnp.bfloat16).astype(jnp.float32)
    avg_ref = jnp.mean(last_b + first_b, axis=1)
    ref = jnp.einsum("bh,hl->bl", avg_ref, params["cls_w"],
                     precision=jax.lax.Precision.HIGHEST) + params["cls_b"]

    assert logits.shape == (B, L)
    assert jnp.allclose(logits, ref, atol=1e-4, rtol=1e-4), (
        jnp.max(jnp.abs(logits - ref)))

    print("KERNEL_OK")
</pallas_src>

<mosaic_0001>
module attributes {stable_mosaic.version = 11 : i64} {
  func.func @_cdn_head_kernel(%arg0: i32, %arg1: i32, %arg2: memref<2x16x32xbf16, #tpu.memory_space<vmem>>, %arg3: memref<2x16x32xbf16, #tpu.memory_space<vmem>>, %arg4: memref<32x128xf32, #tpu.memory_space<vmem>>, %arg5: memref<1x128xf32, #tpu.memory_space<vmem>>, %arg6: memref<2x128xf32, #tpu.memory_space<vmem>>, %arg7: memref<2x32xf32, #tpu.memory_space<vmem>>) attributes {dimension_semantics = [#tpu.dimension_semantics<parallel>, #tpu.dimension_semantics<arbitrary>], iteration_bounds = array<i64: 1, 2>, scalar_prefetch = 0 : i64, scratch_operands = 1 : i64, tpu.core_type = #tpu.core_type<tc>, window_params = [{transform_indices = @transform_0, window_bounds = array<i64: 2, 16, 32>}, {transform_indices = @transform_1, window_bounds = array<i64: 2, 16, 32>}, {pipeline_mode = #tpu.pipeline_mode<synchronous>, transform_indices = @transform_2, window_bounds = array<i64: 32, 128>}, {pipeline_mode = #tpu.pipeline_mode<synchronous>, transform_indices = @transform_3, window_bounds = array<i64: 1, 128>}, {transform_indices = @transform_4, window_bounds = array<i64: 2, 128>}]} {
    %c0_i32 = arith.constant 0 : i32
    %0 = arith.cmpi eq, %arg1, %c0_i32 : i32
    %1 = arith.extui %0 : i1 to i32
    %c0_i32_0 = arith.constant 0 : i32
    %2 = arith.cmpi ne, %1, %c0_i32_0 : i32
    scf.if %2 {
      %cst_12 = arith.constant 0.000000e+00 : f32
      %16 = vector.broadcast %cst_12 : f32 to vector<2x32xf32>
      %c0_13 = arith.constant 0 : index
      %c0_14 = arith.constant 0 : index
      %17 = vector.load %arg7[%c0_13, %c0_14] : memref<2x32xf32, #tpu.memory_space<vmem>>, vector<2x32xf32>
      tpu.vector_store %arg7[%c0_13, %c0_14], %16 {strides = array<i32>} : memref<2x32xf32, #tpu.memory_space<vmem>>, vector<2x32xf32>,
    } else {
    }
    %c0 = arith.constant 0 : index
    %c0_1 = arith.constant 0 : index
    %3 = vector.load %arg7[%c0, %c0_1] : memref<2x32xf32, #tpu.memory_space<vmem>>, vector<2x32xf32>
    %c0_2 = arith.constant 0 : index
    %c0_3 = arith.constant 0 : index
    %c0_4 = arith.constant 0 : index
    %4 = vector.load %arg2[%c0_2, %c0_3, %c0_4] : memref<2x16x32xbf16, #tpu.memory_space<vmem>>, vector<2x16x32xbf16>
    %5 = arith.extf %4 : vector<2x16x32xbf16> to vector<2x16x32xf32>
    %cst = arith.constant dense<0.000000e+00> : vector<2x32xf32>
    %6 = vector.multi_reduction <add>, %5, %cst [1] : vector<2x16x32xf32> to vector<2x32xf32>
    %c0_5 = arith.constant 0 : index
    %c0_6 = arith.constant 0 : index
    %c0_7 = arith.constant 0 : index
    %7 = vector.load %arg3[%c0_5, %c0_6, %c0_7] : memref<2x16x32xbf16, #tpu.memory_space<vmem>>, vector<2x16x32xbf16>
    %8 = arith.extf %7 : vector<2x16x32xbf16> to vector<2x16x32xf32>
    %cst_8 = arith.constant dense<0.000000e+00> : vector<2x32xf32>
    %9 = vector.multi_reduction <add>, %8, %cst_8 [1] : vector<2x16x32xf32> to vector<2x32xf32>
    %10 = arith.addf %6, %9 : vector<2x32xf32>
    %11 = arith.addf %3, %10 : vector<2x32xf32>
    %c0_9 = arith.constant 0 : index
    %c0_10 = arith.constant 0 : index
    %12 = vector.load %arg7[%c0_9, %c0_10] : memref<2x32xf32, #tpu.memory_space<vmem>>, vector<2x32xf32>
    tpu.vector_store %arg7[%c0_9, %c0_10], %11 {strides = array<i32>} : memref<2x32xf32, #tpu.memory_space<vmem>>, vector<2x32xf32>,
    %c1_i32 = arith.constant 1 : i32
    %13 = arith.cmpi eq, %arg1, %c1_i32 : i32
    %14 = arith.extui %13 : i1 to i32
    %c0_i32_11 = arith.constant 0 : i32
    %15 = arith.cmpi ne, %14, %c0_i32_11 : i32
    scf.if %15 {
      %c0_12 = arith.constant 0 : index
      %c0_13 = arith.constant 0 : index
      %16 = vector.load %arg7[%c0_12, %c0_13] : memref<2x32xf32, #tpu.memory_space<vmem>>, vector<2x32xf32>
      %cst_14 = arith.constant 3.125000e-02 : f32
      %17 = vector.broadcast %cst_14 : f32 to vector<2x32xf32>
      %18 = arith.mulf %16, %17 : vector<2x32xf32>
      %c0_15 = arith.constant 0 : index
      %c0_16 = arith.constant 0 : index
      %19 = vector.load %arg4[%c0_15, %c0_16] : memref<32x128xf32, #tpu.memory_space<vmem>>, vector<32x128xf32>
      %cst_17 = arith.constant dense<0.000000e+00> : vector<2x128xf32>
      %20 = tpu.matmul %18, %19, %cst_17 {dimension_numbers = #tpu.dot_dimension_numbers<[1], [0], [0], [1], [0, 0, 1, 1], [], []>} : vector<2x32xf32>, vector<32x128xf32>, vector<2x128xf32> -> vector<2x128xf32>
      %c0_18 = arith.constant 0 : index
      %c0_19 = arith.constant 0 : index
      %21 = vector.load %arg5[%c0_18, %c0_19] : memref<1x128xf32, #tpu.memory_space<vmem>>, vector<1x128xf32>
      %22 = vector.broadcast %21 : vector<1x128xf32> to vector<2x128xf32>
      %23 = arith.addf %20, %22 : vector<2x128xf32>
      %c0_20 = arith.constant 0 : index
      %c0_21 = arith.constant 0 : index
      %24 = vector.load %arg6[%c0_20, %c0_21] : memref<2x128xf32, #tpu.memory_space<vmem>>, vector<2x128xf32>
      tpu.vector_store %arg6[%c0_20, %c0_21], %23 {strides = array<i32>} : memref<2x128xf32, #tpu.memory_space<vmem>>, vector<2x128xf32>,
    } else {
    }
    return
  }
  func.func @transform_0(%arg0: i32, %arg1: i32) -> (i32, i32, i32) {
    %c0_i32 = arith.constant 0 : i32
    %c0_i32_0 = arith.constant 0 : i32
    return %arg0, %arg1, %c0_i32 : i32, i32, i32
  }
  func.func @transform_1(%arg0: i32, %arg1: i32) -> (i32, i32, i32) {
    %c0_i32 = arith.constant 0 : i32
    %c0_i32_0 = arith.constant 0 : i32
    return %arg0, %arg1, %c0_i32 : i32, i32, i32
  }
  func.func @transform_2(%arg0: i32, %arg1: i32) -> (i32, i32) {
    %c0_i32 = arith.constant 0 : i32
    %c0_i32_0 = arith.constant 0 : i32
    %c0_i32_1 = arith.constant 0 : i32
    return %c0_i32, %c0_i32_0 : i32, i32
  }
  func.func @transform_3(%arg0: i32, %arg1: i32) -> (i32, i32) {
    %c0_i32 = arith.constant 0 : i32
    %c0_i32_0 = arith.constant 0 : i32
    %c0_i32_1 = arith.constant 0 : i32
    return %c0_i32, %c0_i32_0 : i32, i32
  }
  func.func @transform_4(%arg0: i32, %arg1: i32) -> (i32, i32) {
    %c0_i32 = arith.constant 0 : i32
    %c0_i32_0 = arith.constant 0 : i32
    return %arg0, %c0_i32 : i32, i32
  }
}

module attributes {stable_mosaic.version = 11 : i64} {
  func.func @_cdn_head_kernel(%arg0: i32, %arg1: i32, %arg2: memref<2x16x32xbf16, #tpu.memory_space<vmem>>, %arg3: memref<2x16x32xbf16, #tpu.memory_space<vmem>>, %arg4: memref<32x128xf32, #tpu.memory_space<vmem>>, %arg5: memref<1x128xf32, #tpu.memory_space<vmem>>, %arg6: memref<2x128xf32, #tpu.memory_space<vmem>>, %arg7: memref<2x32xf32, #tpu.memory_space<vmem>>) attributes {dimension_semantics = [#tpu.dimension_semantics<parallel>, #tpu.dimension_semantics<arbitrary>], iteration_bounds = array<i64: 1, 2>, scalar_prefetch = 0 : i64, scratch_operands = 1 : i64, tpu.core_type = #tpu.core_type<tc>, window_params = [{transform_indices = @transform_0, window_bounds = array<i64: 2, 16, 32>}, {transform_indices = @transform_1, window_bounds = array<i64: 2, 16, 32>}, {pipeline_mode = #tpu.pipeline_mode<synchronous>, transform_indices = @transform_2, window_bounds = array<i64: 32, 128>}, {pipeline_mode = #tpu.pipeline_mode<synchronous>, transform_indices = @transform_3, window_bounds = array<i64: 1, 128>}, {transform_indices = @transform_4, window_bounds = array<i64: 2, 128>}]} {
    %c0_i32 = arith.constant 0 : i32
    %0 = arith.cmpi eq, %arg1, %c0_i32 : i32
    %1 = arith.extui %0 : i1 to i32
    %c0_i32_0 = arith.constant 0 : i32
    %2 = arith.cmpi ne, %1, %c0_i32_0 : i32
    scf.if %2 {
      %cst_12 = arith.constant 0.000000e+00 : f32
      %16 = vector.broadcast %cst_12 : f32 to vector<2x32xf32>
      %c0_13 = arith.constant 0 : index
      %c0_14 = arith.constant 0 : index
      %17 = vector.load %arg7[%c0_13, %c0_14] : memref<2x32xf32, #tpu.memory_space<vmem>>, vector<2x32xf32>
      tpu.vector_store %arg7[%c0_13, %c0_14], %16 {strides = array<i32>} : memref<2x32xf32, #tpu.memory_space<vmem>>, vector<2x32xf32>,
    } else {
    }
    %c0 = arith.constant 0 : index
    %c0_1 = arith.constant 0 : index
    %3 = vector.load %arg7[%c0, %c0_1] : memref<2x32xf32, #tpu.memory_space<vmem>>, vector<2x32xf32>
    %c0_2 = arith.constant 0 : index
    %c0_3 = arith.constant 0 : index
    %c0_4 = arith.constant 0 : index
    %4 = vector.load %arg2[%c0_2, %c0_3, %c0_4] : memref<2x16x32xbf16, #tpu.memory_space<vmem>>, vector<2x16x32xbf16>
    %5 = arith.extf %4 : vector<2x16x32xbf16> to vector<2x16x32xf32>
    %cst = arith.constant dense<0.000000e+00> : vector<2x32xf32>
    %6 = vector.multi_reduction <add>, %5, %cst [1] : vector<2x16x32xf32> to vector<2x32xf32>
    %c0_5 = arith.constant 0 : index
    %c0_6 = arith.constant 0 : index
    %c0_7 = arith.constant 0 : index
    %7 = vector.load %arg3[%c0_5, %c0_6, %c0_7] : memref<2x16x32xbf16, #tpu.memory_space<vmem>>, vector<2x16x32xbf16>
    %8 = arith.extf %7 : vector<2x16x32xbf16> to vector<2x16x32xf32>
    %cst_8 = arith.constant dense<0.000000e+00> : vector<2x32xf32>
    %9 = vector.multi_reduction <add>, %8, %cst_8 [1] : vector<2x16x32xf32> to vector<2x32xf32>
    %10 = arith.addf %6, %9 : vector<2x32xf32>
    %11 = arith.addf %3, %10 : vector<2x32xf32>
    %c0_9 = arith.constant 0 : index
    %c0_10 = arith.constant 0 : index
    %12 = vector.load %arg7[%c0_9, %c0_10] : memref<2x32xf32, #tpu.memory_space<vmem>>, vector<2x32xf32>
    tpu.vector_store %arg7[%c0_9, %c0_10], %11 {strides = array<i32>} : memref<2x32xf32, #tpu.memory_space<vmem>>, vector<2x32xf32>,
    %c1_i32 = arith.constant 1 : i32
    %13 = arith.cmpi eq, %arg1, %c1_i32 : i32
    %14 = arith.extui %13 : i1 to i32
    %c0_i32_11 = arith.constant 0 : i32
    %15 = arith.cmpi ne, %14, %c0_i32_11 : i32
    scf.if %15 {
      %c0_12 = arith.constant 0 : index
      %c0_13 = arith.constant 0 : index
      %16 = vector.load %arg7[%c0_12, %c0_13] : memref<2x32xf32, #tpu.memory_space<vmem>>, vector<2x32xf32>
      %cst_14 = arith.constant 3.125000e-02 : f32
      %17 = vector.broadcast %cst_14 : f32 to vector<2x32xf32>
      %18 = arith.mulf %16, %17 : vector<2x32xf32>
      %c0_15 = arith.constant 0 : index
      %c0_16 = arith.constant 0 : index
      %19 = vector.load %arg4[%c0_15, %c0_16] : memref<32x128xf32, #tpu.memory_space<vmem>>, vector<32x128xf32>
      %cst_17 = arith.constant dense<0.000000e+00> : vector<2x128xf32>
      %20 = tpu.matmul %18, %19, %cst_17 {dimension_numbers = #tpu.dot_dimension_numbers<[1], [0], [0], [1], [0, 0, 1, 1], [], []>} : vector<2x32xf32>, vector<32x128xf32>, vector<2x128xf32> -> vector<2x128xf32>
      %c0_18 = arith.constant 0 : index
      %c0_19 = arith.constant 0 : index
      %21 = vector.load %arg5[%c0_18, %c0_19] : memref<1x128xf32, #tpu.memory_space<vmem>>, vector<1x128xf32>
      %22 = vector.broadcast %21 : vector<1x128xf32> to vector<2x128xf32>
      %23 = arith.addf %20, %22 : vector<2x128xf32>
      %c0_20 = arith.constant 0 : index
      %c0_21 = arith.constant 0 : index
      %24 = vector.load %arg6[%c0_20, %c0_21] : memref<2x128xf32, #tpu.memory_space<vmem>>, vector<2x128xf32>
      tpu.vector_store %arg6[%c0_20, %c0_21], %23 {strides = array<i32>} : memref<2x128xf32, #tpu.memory_space<vmem>>, vector<2x128xf32>,
    } else {
    }
    return
  }
  func.func @transform_0(%arg0: i32, %arg1: i32) -> (i32, i32, i32) {
    %c0_i32 = arith.constant 0 : i32
    %c0_i32_0 = arith.constant 0 : i32
    return %arg0, %arg1, %c0_i32 : i32, i32, i32
  }
  func.func @transform_1(%arg0: i32, %arg1: i32) -> (i32, i32, i32) {
    %c0_i32 = arith.constant 0 : i32
    %c0_i32_0 = arith.constant 0 : i32
    return %arg0, %arg1, %c0_i32 : i32, i32, i32
  }
  func.func @transform_2(%arg0: i32, %arg1: i32) -> (i32, i32) {
    %c0_i32 = arith.constant 0 : i32
    %c0_i32_0 = arith.constant 0 : i32
    %c0_i32_1 = arith.constant 0 : i32
    return %c0_i32, %c0_i32_0 : i32, i32
  }
  func.func @transform_3(%arg0: i32, %arg1: i32) -> (i32, i32) {
    %c0_i32 = arith.constant 0 : i32
    %c0_i32_0 = arith.constant 0 : i32
    %c0_i32_1 = arith.constant 0 : i32
    return %c0_i32, %c0_i32_0 : i32, i32
  }
  func.func @transform_4(%arg0: i32, %arg1: i32) -> (i32, i32) {
    %c0_i32 = arith.constant 0 : i32
    %c0_i32_0 = arith.constant 0 : i32
    return %arg0, %c0_i32 : i32, i32
  }
}

</mosaic_0001>

<llo_original>
// kernel: tpu_custom_call.1
$region0: #{tpu_custom_call.1}
  #allocation0 [shape = 'u32[]', space=smem, size = 0x4, offset = 0x4, fixed_abs, tag = 'smem constant byte address 0x4 - core index']
  #allocation1 [shape = 'u32[144,128]{1,0:T(1,128)}', space=vmem, size = 0x12000, scoped, tag = 'internal scratch']
  #allocation2 [shape = 'f32[2,32]{1,0:T(2,128)}', space=vmem, size = 0x400, scoped, tag = 'scratch operand']
  #allocation10 [shape = 's32[]', space=sflag, size = 0x4, offset = 0, fixed_abs, tag = 'sflag constant byte address 0x0 - dummy sync flag']
  #allocation12 [shape = 's32[]', space=sflag, size = 0x4, offset = 0, fixed_abs, tag = 'sflag constant byte address 0x0 - dummy sync flag']
  %s0 = inlined_call_operand.hbm [shape: bf16[2,32,32], index: 0, kind: input, shape index: {}]
  %s1 = inlined_call_operand.hbm [shape: bf16[2,32,32], index: 1, kind: input, shape index: {}]
  %s2 = inlined_call_operand.hbm [shape: f32[32,128], index: 2, kind: input, shape index: {}]
  %s3 = inlined_call_operand.vmem [shape: f32[1,128], index: 3, kind: input, shape index: {}]
  %s4 = inlined_call_operand.hbm [shape: f32[2,128], index: 4, kind: output, shape index: {}]
  %s5 = sld [smem:[#allocation0]]
  $region69: #{tpu_custom_call.1} parent=0
    _
  %s7 = ssub.s32 1, %s5
  %s8 = scalar_select 0, %s7, %s5
  $region1: #{tpu_custom_call.1} parent=0
    #allocation3 [shape = 'u8[16384]{0}', space=vmem, size = 0x4000, scoped, tag = 'input window, operand 0']
    #allocation4 [shape = 's32[2]{0}', space=sflag, size = 0x8, scoped, tag = 'scoped memory for tpu_custom_call.1']
    #allocation5 [shape = 's32[2]{0}', space=sflag, size = 0x8, scoped, tag = 'scoped memory for tpu_custom_call.1']
    #allocation6 [shape = 'u8[16384]{0}', space=vmem, size = 0x4000, scoped, tag = 'input window, operand 1']
    #allocation7 [shape = 's32[2]{0}', space=sflag, size = 0x8, scoped, tag = 'scoped memory for tpu_custom_call.1']
    #allocation8 [shape = 'u8[16384]{0}', space=vmem, size = 0x4000, scoped, tag = 'input window, operand 2, single buffered']
    #allocation9 [shape = 'u8[1024]{0}', space=vmem, size = 0x400, scoped, tag = 'output window, operand 0, single buffered']
    %9 = vsyncpa [#allocation4], 0
    %s10 = scalar_lea.sflag [#allocation4], 1
    %11 = vsyncpa %s10, 0
    %12 = vsyncpa [#allocation7], 0
    %s13 = scalar_lea.sflag [#allocation7], 1
    %14 = vsyncpa %s13, 0
    %15 = vsyncpa [#allocation5], 0
    loop: start=0, step=1, limit=4
    $region2: #{tpu_custom_call.1} parent=1 // loop_pre_header
      _
    $region3: #{tpu_custom_call.1} parent=1 // loop_header
      %s17 = sphi 0, %s21
      %p18 = scmp.ge.s32.totalorder %s17, 4
      %s24 = sphi 0, %s36
      %s25 = sphi 0, %s32
      %s26 = sphi 0, %s24
      %s27 = sphi 0, %s25
      %s28 = sphi 0, %s26
      %s29 = sphi 0, %s27
      %s41 = sphi 0, %s43
      %s44 = sphi 0, %s41
      %s45 = sphi 0, %s44
      %s61 = sphi 0, %s45
      %s69 = sphi 0, %s71
      %s72 = sphi 0, %s69
      %s73 = sphi 0, %s72
      %s89 = sphi 0, %s73
      %s93 = sphi 0, %s93
      %s95 = sphi 0, %s93
      %s96 = sphi 0, %s95
      %s110 = sphi 0, %s96
      %s114 = sphi 0, %s114
      %s116 = sphi 0, %s114
      %s117 = sphi 0, %s116
      %s131 = sphi 0, %s117
      %s137 = sphi 0, %s139
      %s140 = sphi 0, %s137
      %s141 = sphi 0, %s140
      %s157 = sphi 0, %s141
    $region4: #{tpu_custom_call.1} parent=1 // loop_header_branch
      %20 = sbr.rel (%p18) target = $region8
    $region5: #{tpu_custom_call.1} parent=1 // loop_body
      %s22 = ssub.s32 %s17, 1
      %s23 = ssub.s32 %s17, 2
      %s30 = sadd.s32 1, %s25
      %p31 = scmp.ge.s32.totalorder %s30, 2
      %s32 = scalar_select %p31, 0, %s30
      %s33 = sadd.s32 1, %s24
      %s34 = scalar_select %p31, %s33, %s24
      %p35 = scmp.ge.s32.totalorder %s34, 1
      %s36 = scalar_select %p35, 0, %s34
      %s37 = ssub.s32 %s24, %s36
      %s38 = ssub.s32 %s25, %s32
      %s39 = sor.u32 %s37, %s38
      %p40 = scmp.eq.s32.totalorder %s39, 0
      %s42 = sadd.s32 %s41, 1
      %s43 = scalar_select %p40, %s41, %s42
      %p46 = pneg %p40
      %p47 = scmp.eq.s32.totalorder %s17, 1
      %p48 = por %p46, %p47
      %p49 = scmp.ne.s32.totalorder %s41, %s44
      %p50 = scmp.eq.s32.totalorder %s17, 0
      %p51 = por %p49, %p50
      %p52 = scmp.ne.s32.totalorder %s41, %s44
      %p53 = scmp.eq.s32.totalorder %s22, 1
      %p54 = por %p52, %p53
      %p55 = scmp.ne.s32.totalorder %s44, %s45
      %p56 = scmp.eq.s32.totalorder %s22, 0
      %p57 = por %p55, %p56
      %p58 = scmp.ne.s32.totalorder %s44, %s45
      %p59 = scmp.eq.s32.totalorder %s23, 1
      %p60 = por %p58, %p59
      %p62 = scmp.ne.s32.totalorder %s45, %s61
      %p63 = scmp.eq.s32.totalorder %s23, 0
      %p64 = por %p62, %p63
      %s65 = ssub.s32 %s24, %s36
      %s66 = ssub.s32 %s25, %s32
      %s67 = sor.u32 %s65, %s66
      %p68 = scmp.eq.s32.totalorder %s67, 0
      %s70 = sadd.s32 %s69, 1
      %s71 = scalar_select %p68, %s69, %s70
      %p74 = pneg %p68
      %p75 = scmp.eq.s32.totalorder %s17, 1
      %p76 = por %p74, %p75
      %p77 = scmp.ne.s32.totalorder %s69, %s72
      %p78 = scmp.eq.s32.totalorder %s17, 0
      %p79 = por %p77, %p78
      %p80 = scmp.ne.s32.totalorder %s69, %s72
      %p81 = scmp.eq.s32.totalorder %s22, 1
      %p82 = por %p80, %p81
      %p83 = scmp.ne.s32.totalorder %s72, %s73
      %p84 = scmp.eq.s32.totalorder %s22, 0
      %p85 = por %p83, %p84
      %p86 = scmp.ne.s32.totalorder %s72, %s73
      %p87 = scmp.eq.s32.totalorder %s23, 1
      %p88 = por %p86, %p87
      %p90 = scmp.ne.s32.totalorder %s73, %s89
      %p91 = scmp.eq.s32.totalorder %s23, 0
      %p92 = por %p90, %p91
      %s94 = sadd.s32 %s93, 1
      %p97 = scmp.eq.s32.totalorder %s17, 1
      %p98 = scmp.ne.s32.totalorder %s93, %s95
      %p99 = scmp.eq.s32.totalorder %s17, 0
      %p100 = por %p98, %p99
      %p101 = scmp.ne.s32.totalorder %s93, %s95
      %p102 = scmp.eq.s32.totalorder %s22, 1
      %p103 = por %p101, %p102
      %p104 = scmp.ne.s32.totalorder %s95, %s96
      %p105 = scmp.eq.s32.totalorder %s22, 0
      %p106 = por %p104, %p105
      %p107 = scmp.ne.s32.totalorder %s95, %s96
      %p108 = scmp.eq.s32.totalorder %s23, 1
      %p109 = por %p107, %p108
      %p111 = scmp.ne.s32.totalorder %s96, %s110
      %p112 = scmp.eq.s32.totalorder %s23, 0
      %p113 = por %p111, %p112
      %s115 = sadd.s32 %s114, 1
      %p118 = scmp.eq.s32.totalorder %s17, 1
      %p119 = scmp.ne.s32.totalorder %s114, %s116
      %p120 = scmp.eq.s32.totalorder %s17, 0
      %p121 = por %p119, %p120
      %p122 = scmp.ne.s32.totalorder %s114, %s116
      %p123 = scmp.eq.s32.totalorder %s22, 1
      %p124 = por %p122, %p123
      %p125 = scmp.ne.s32.totalorder %s116, %s117
      %p126 = scmp.eq.s32.totalorder %s22, 0
      %p127 = por %p125, %p126
      %p128 = scmp.ne.s32.totalorder %s116, %s117
      %p129 = scmp.eq.s32.totalorder %s23, 1
      %p130 = por %p128, %p129
      %p132 = scmp.ne.s32.totalorder %s117, %s131
      %p133 = scmp.eq.s32.totalorder %s23, 0
      %p134 = por %p132, %p133
      %s135 = ssub.s32 %s24, %s36
      %p136 = scmp.eq.s32.totalorder %s135, 0
      %s138 = sadd.s32 %s137, 1
      %s139 = scalar_select %p136, %s137, %s138
      %p142 = pneg %p136
      %p143 = scmp.eq.s32.totalorder %s17, 1
      %p144 = por %p142, %p143
      %p145 = scmp.ne.s32.totalorder %s137, %s140
      %p146 = scmp.eq.s32.totalorder %s17, 0
      %p147 = por %p145, %p146
      %p148 = scmp.ne.s32.totalorder %s137, %s140
      %p149 = scmp.eq.s32.totalorder %s22, 1
      %p150 = por %p148, %p149
      %p151 = scmp.ne.s32.totalorder %s140, %s141
      %p152 = scmp.eq.s32.totalorder %s22, 0
      %p153 = por %p151, %p152
      %p154 = scmp.ne.s32.totalorder %s140, %s141
      %p155 = scmp.eq.s32.totalorder %s23, 1
      %p156 = por %p154, %p155
      %p158 = scmp.ne.s32.totalorder %s141, %s157
      %p159 = scmp.eq.s32.totalorder %s23, 0
      %p160 = por %p158, %p159
      %p161 = scmp.le.s32.totalorder 1, %s17
      %p162 = scmp.lt.s32.totalorder %s17, 3
      %p163 = pnand %p161, %p162
      %p164 = pneg %p163
      // Predicated region
      $region9: #{tpu_custom_call.1} parent=5 // pred_check
        _
      $region10: #{tpu_custom_call.1} parent=5 // pred_check_branch
        %166 = sbr.rel (%p163) target = $region12
      $region11: #{tpu_custom_call.1} parent=5 // pred_region
        %s167 = ssub.s32 %s17, 1
        // Predicated region
        $region13: #{tpu_custom_call.1} parent=11 // pred_check
          %p168 = pneg %p106
        $region14: #{tpu_custom_call.1} parent=11 // pred_check_branch
          %170 = sbr.rel (%p168) target = $region16
        $region15: #{tpu_custom_call.1} parent=11 // pred_region
          %s172 = ssub.s32 512, 512
          %173 = vsyncadd [#allocation7], %s172
          %s174 = sshll.u32 [#allocation8], 4
          %s175 = int_to_ptr.vmem [resolvable:$true] %s174
          %180 = dma.hbm_to_vmem [thread:$0]  %s2, 512, %s175, [#allocation7], 128, 128, 8
        $region16: #{tpu_custom_call.1} parent=11 // pred_fallthru
          _
        // Predicated region
        $region17: #{tpu_custom_call.1} parent=11 // pred_check
          %p181 = pneg %p127
        $region18: #{tpu_custom_call.1} parent=11 // pred_check_branch
          %183 = sbr.rel (%p181) target = $region20
        $region19: #{tpu_custom_call.1} parent=11 // pred_region
          _
        $region20: #{tpu_custom_call.1} parent=11 // pred_fallthru
          _
      $region12: #{tpu_custom_call.1} parent=5 // pred_fallthru
        _
      %p184 = scmp.lt.s32.totalorder %s17, 2
      // Predicated region
      $region21: #{tpu_custom_call.1} parent=5 // pred_check
        %p185 = pneg %p184
      $region22: #{tpu_custom_call.1} parent=5 // pred_check_branch
        %187 = sbr.rel (%p185) target = $region24
      $region23: #{tpu_custom_call.1} parent=5 // pred_region
        // Predicated region
        $region25: #{tpu_custom_call.1} parent=23 // pred_check
          %p188 = pneg %p51
        $region26: #{tpu_custom_call.1} parent=23 // pred_check_branch
          %190 = sbr.rel (%p188) target = $region28
        $region27: #{tpu_custom_call.1} parent=23 // pred_region
          #allocation11 [shape = 'u32[6]{0}', space=smem, size = 0x18, scoped, tag = 'DMA stride descriptor']
          %s191 = sand.u32 %s41, 1
          %s192 = scalar_lea.sflag [#allocation4], %s191
          %s193 = sand.u32 %s41, 1
          %s194 = smul.addr %s193, 16
          %s195 = scalar_lea.vmem [#allocation3], %s194
          %s196 = smul.u32 2, %s24
          %s197 = smul.u32 2, %s25
          %s199 = ssub.s32 256, 256
          %200 = vsyncadd %s192, %s199
          %s201 = smul.addr %s196, 4
          %s202 = sadd.s32 %s197, %s201
          %s203 = smul.addr %s202, 64
          %s204 = scalar_lea.hbm %s0, %s203
          %s206 = sshll.u32 1, 14
          %s207 = sxor.u32 4294967295, %s206
          %s209 = sld [smem:[#allocation0]]
          %s210 = sadd.s32 2, %s209
          %s212 = sshll.u32 7, 26
          %s213 = sxor.u32 4294967295, %s212
          %s214 = sand.u32 0, %s213
          %s215 = sshll.u32 %s210, 26
          %s216 = sor.u32 %s214, %s215
          %s217 = sshll.u32 %s195, 4
          %s218 = int_to_ptr.vmem [resolvable:$true] %s217
          %224 = sst [smem:[#allocation11]] 256
          %s225 = scalar_lea.smem [#allocation11], 1
          %226 = sst [smem:[%s225]] 128
          %s227 = scalar_lea.smem [#allocation11], 2
          %228 = sst [smem:[%s227]] 2
          %s229 = scalar_lea.smem [#allocation11], 3
          %230 = sst [smem:[%s229]] 64
          %s231 = scalar_lea.smem [#allocation11], 4
          %232 = sst [smem:[%s231]] 64
          %s233 = scalar_lea.smem [#allocation11], 5
          %234 = sst [smem:[%s233]] 4
          %236 = dma.general %s204, 256, %s218, %s192, [#allocation10], [#allocation11], %s216, 0
        $region28: #{tpu_custom_call.1} parent=23 // pred_fallthru
          _
        // Predicated region
        $region29: #{tpu_custom_call.1} parent=23 // pred_check
          %p237 = pneg %p79
        $region30: #{tpu_custom_call.1} parent=23 // pred_check_branch
          %239 = sbr.rel (%p237) target = $region32
        $region31: #{tpu_custom_call.1} parent=23 // pred_region
          #allocation13 [shape = 'u32[6]{0}', space=smem, size = 0x18, scoped, tag = 'DMA stride descriptor']
          %s240 = sand.u32 %s17, 1
          %s241 = scalar_lea.sflag [#allocation7], %s240
          %s242 = sand.u32 %s69, 1
          %s243 = smul.addr %s242, 16
          %s244 = scalar_lea.vmem [#allocation6], %s243
          %s245 = smul.u32 2, %s24
          %s246 = smul.u32 2, %s25
          %s248 = ssub.s32 256, 256
          %249 = vsyncadd %s241, %s248
          %s250 = smul.addr %s245, 4
          %s251 = sadd.s32 %s246, %s250
          %s252 = smul.addr %s251, 64
          %s253 = scalar_lea.hbm %s1, %s252
          %s255 = sshll.u32 1, 14
          %s256 = sxor.u32 4294967295, %s255
          %s258 = sld [smem:[#allocation0]]
          %s259 = sadd.s32 2, %s258
          %s261 = sshll.u32 7, 26
          %s262 = sxor.u32 4294967295, %s261
          %s263 = sand.u32 0, %s262
          %s264 = sshll.u32 %s259, 26
          %s265 = sor.u32 %s263, %s264
          %s266 = sshll.u32 %s244, 4
          %s267 = int_to_ptr.vmem [resolvable:$true] %s266
          %273 = sst [smem:[#allocation13]] 256
          %s274 = scalar_lea.smem [#allocation13], 1
          %275 = sst [smem:[%s274]] 128
          %s276 = scalar_lea.smem [#allocation13], 2
          %277 = sst [smem:[%s276]] 2
          %s278 = scalar_lea.smem [#allocation13], 3
          %279 = sst [smem:[%s278]] 64
          %s280 = scalar_lea.smem [#allocation13], 4
          %281 = sst [smem:[%s280]] 64
          %s282 = scalar_lea.smem [#allocation13], 5
          %283 = sst [smem:[%s282]] 4
          %285 = dma.general %s253, 256, %s267, %s241, [#allocation12], [#allocation13], %s265, 0
        $region32: #{tpu_custom_call.1} parent=23 // pred_fallthru
          _
      $region24: #{tpu_custom_call.1} parent=5 // pred_fallthru
        _
      %p286 = scmp.le.s32.totalorder 1, %s17
      %p287 = scmp.lt.s32.totalorder %s17, 3
      %p288 = pnand %p286, %p287
      %p289 = pneg %p288
      // Predicated region
      $region33: #{tpu_custom_call.1} parent=5 // pred_check
        _
      $region34: #{tpu_custom_call.1} parent=5 // pred_check_branch
        %291 = sbr.rel (%p288) target = $region36
      $region35: #{tpu_custom_call.1} parent=5 // pred_region
        %s292 = ssub.s32 %s17, 1
        %s293 = sand.u32 %s44, 1
        %s294 = scalar_lea.sflag [#allocation4], %s293
        %s295 = sand.u32 %s44, 1
        %s296 = smul.addr %s295, 16
        %s297 = scalar_lea.vmem [#allocation3], %s296
        // Predicated region
        $region37: #{tpu_custom_call.1} parent=35 // pred_check
          %p298 = pneg %p57
        $region38: #{tpu_custom_call.1} parent=35 // pred_check_branch
          %300 = sbr.rel (%p298) target = $region40
        $region39: #{tpu_custom_call.1} parent=35 // pred_region
          %301 = dma.done %s294, 256
        $region40: #{tpu_custom_call.1} parent=35 // pred_fallthru
          _
        %s302 = sand.u32 %s22, 1
        %s303 = scalar_lea.sflag [#allocation7], %s302
        %s304 = sand.u32 %s72, 1
        %s305 = smul.addr %s304, 16
        %s306 = scalar_lea.vmem [#allocation6], %s305
        // Predicated region
        $region41: #{tpu_custom_call.1} parent=35 // pred_check
          %p307 = pneg %p85
        $region42: #{tpu_custom_call.1} parent=35 // pred_check_branch
          %309 = sbr.rel (%p307) target = $region44
        $region43: #{tpu_custom_call.1} parent=35 // pred_region
          %310 = dma.done %s303, 256
        $region44: #{tpu_custom_call.1} parent=35 // pred_fallthru
          _
        // Predicated region
        $region45: #{tpu_custom_call.1} parent=35 // pred_check
          %p311 = pneg %p106
        $region46: #{tpu_custom_call.1} parent=35 // pred_check_branch
          %313 = sbr.rel (%p311) target = $region48
        $region47: #{tpu_custom_call.1} parent=35 // pred_region
          %314 = dma.done [#allocation7], 512
        $region48: #{tpu_custom_call.1} parent=35 // pred_fallthru
          _
        %s315 = sand.u32 %s44, 1
        %s316 = scalar_lea.sflag [#allocation4], %s315
        %s317 = sand.u32 %s44, 1
        %s318 = smul.addr %s317, 16
        %s319 = scalar_lea.vmem [#allocation3], %s318
        %p320 = pneg %p57
        %p321 = pneg %p54
        %s322 = sand.u32 %s22, 1
        %s323 = scalar_lea.sflag [#allocation7], %s322
        %s324 = sand.u32 %s72, 1
        %s325 = smul.addr %s324, 16
        %s326 = scalar_lea.vmem [#allocation6], %s325
        %p327 = pneg %p85
        %p328 = pneg %p82
        %p329 = pneg %p106
        %p330 = pneg %p103
        %p331 = pneg %p127
        %p332 = pneg %p124
        %p333 = pneg %p153
        %p334 = pneg %p150
        %s335 = smul.u32 2, %s26
        %s336 = smul.u32 2, %s27
        %s337 = smul.u32 2, %s26
        %s338 = smul.u32 2, %s27
        %p339 = scmp.eq.s32.totalorder %s27, 0
        // Predicated region
        $region49: #{tpu_custom_call.1} parent=35 // pred_check
          %p340 = pneg %p339
        $region50: #{tpu_custom_call.1} parent=35 // pred_check_branch
          %342 = sbr.rel (%p340) target = $region52
        $region51: #{tpu_custom_call.1} parent=35 // pred_region
          %vm343 = vcmask 254976
          %344 = vst.msk [vmem:[#allocation2] sm:$0x3] %vm343, 0.0
        $region52: #{tpu_custom_call.1} parent=35 // pred_fallthru
          _
        %v345 = vld [vmem:[#allocation2] sm:$0x3]
        %v346 = vld [vmem:[%s297] sm:$0xf]
        %v347 = vld [vmem:[%s297 + $0x4] sm:$0xf]
        %v348 = vld [vmem:[%s297 + $0x8] sm:$0xf]
        %v349 = vld [vmem:[%s297 + $0xc] sm:$0xf]
        %v350 = vunpack.c.l.bf16 %v346
        %v351 = vunpack.c.l.bf16 %v347
        %v352 = vunpack.c.l.bf16 %v348
        %v353 = vunpack.c.l.bf16 %v349
        %vm354 = vcmask 261120
        %v355 = vsel %vm354, %v350, 0.0
        %v356 = vsel %vm354, %v351, 0.0
        %v357 = vadd.f32 %v355, %v356
        %v358 = vrot.slane %v357, 4
        %v359 = vadd.f32 %v357, %v358
        %v360 = vrot.slane %v359, 2
        %v361 = vadd.f32 %v359, %v360
        %v362 = vrot.slane %v361, 1
        %v363 = vadd.f32 %v361, %v362
        %v364 = vsel %vm354, %v352, 0.0
        %v365 = vsel %vm354, %v353, 0.0
        %v366 = vadd.f32 %v364, %v365
        %v367 = vrot.slane %v366, 4
        %v368 = vadd.f32 %v366, %v367
        %v369 = vrot.slane %v368, 2
        %v370 = vadd.f32 %v368, %v369
        %v371 = vrot.slane %v370, 1
        %v372 = vadd.f32 %v370, %v371
        %v373 = vld [vmem:[%s306] sm:$0xf]
        %v374 = vld [vmem:[%s306 + $0x4] sm:$0xf]
        %v375 = vld [vmem:[%s306 + $0x8] sm:$0xf]
        %v376 = vld [vmem:[%s306 + $0xc] sm:$0xf]
        %v377 = vunpack.c.l.bf16 %v373
        %v378 = vunpack.c.l.bf16 %v374
        %v379 = vunpack.c.l.bf16 %v375
        %v380 = vunpack.c.l.bf16 %v376
        %v381 = vsel %vm354, %v377, 0.0
        %v382 = vsel %vm354, %v378, 0.0
        %v383 = vadd.f32 %v381, %v382
        %v384 = vrot.slane %v383, 4
        %v385 = vadd.f32 %v383, %v384
        %v386 = vrot.slane %v385, 2
        %v387 = vadd.f32 %v385, %v386
        %v388 = vrot.slane %v387, 1
        %v389 = vadd.f32 %v387, %v388
        %v390 = vsel %vm354, %v379, 0.0
        %v391 = vsel %vm354, %v380, 0.0
        %v392 = vadd.f32 %v390, %v391
        %v393 = vrot.slane %v392, 4
        %v394 = vadd.f32 %v392, %v393
        %v395 = vrot.slane %v394, 2
        %v396 = vadd.f32 %v394, %v395
        %v397 = vrot.slane %v396, 1
        %v398 = vadd.f32 %v396, %v397
        %v399 = vadd.f32 %v363, %v389
        %v400 = vadd.f32 %v372, %v398
        %vm403 = vcmask 1041409
        %v404 = vsel %vm403, %v400, %v399
        %v406 = vadd.f32 %v345, %v404
        %vm407 = vcmask 254976
        %408 = vst.msk [vmem:[#allocation2] sm:$0x3] %vm407, %v406
        %p409 = scmp.eq.s32.totalorder %s27, 1
        // Predicated region
        $region53: #{tpu_custom_call.1} parent=35 // pred_check
          %p410 = pneg %p409
        $region54: #{tpu_custom_call.1} parent=35 // pred_check_branch
          %412 = sbr.rel (%p410) target = $region56
        $region55: #{tpu_custom_call.1} parent=35 // pred_region
          %v413 = vld [vmem:[#allocation2] sm:$0x3]
          %v414 = vmul.f32 %v413, 0.03125
          %v415 = vld [vmem:[#allocation8] sm:$0xff]
          %v416 = vld [vmem:[#allocation8 + $0x8] sm:$0xff]
          %v417 = vld [vmem:[#allocation8 + $0x10] sm:$0xff]
          %v418 = vld [vmem:[#allocation8 + $0x18] sm:$0xff]
          %v419 = vld [vmem:[%s3] sm:$0x1]
          %v421 = vlaneseq
          %v422 = vshrl.u32 %v421, 7
          %v423 = vsub.s32 0, %v422
          %v424 = vrot.slane %v419, %v423
          %v427 = vsel %vm354, %v414, 0
          %429 = vmatprep.subr.mxu0 0.0
          %430 = vmatpush1.msra.mxu0 %v415
          %431 = vmatprep.subr.mxu0 0.0
          %432 = vmatpush1.msra.mxu0 %v416
          %433 = vmatprep.subr.mxu0 0.0
          %434 = vmatpush1.msra.mxu0 %v417
          %435 = vmatprep.subr.mxu0 0.0
          %436 = vmatpush1.msra.mxu0 %v418
          %437 = vmatprep.subr.mxu0 0.0
          %438 = vmatpush1.msra.mxu0 0.0
          %439 = vmatprep.subr.mxu0 0.0
          %440 = vmatpush1.msra.mxu0 0.0
          %441 = vmatprep.subr.mxu0 0.0
          %442 = vmatpush1.msra.mxu0 0.0
          %443 = vmatprep.subr.mxu0 0.0
          %444 = vmatpush1.msra.mxu0 0.0
          %445 = vmatprep.subr.mxu0 0.0
          %446 = vmatpush1.msra.mxu0 0.0
          %447 = vmatprep.subr.mxu0 0.0
          %448 = vmatpush1.msra.mxu0 0.0
          %449 = vmatprep.subr.mxu0 0.0
          %450 = vmatpush1.msra.mxu0 0.0
          %451 = vmatprep.subr.mxu0 0.0
          %452 = vmatpush1.msra.mxu0 0.0
          %453 = vmatprep.subr.mxu0 0.0
          %454 = vmatpush1.msra.mxu0 0.0
          %455 = vmatprep.subr.mxu0 0.0
          %456 = vmatpush1.msra.mxu0 0.0
          %457 = vmatprep.subr.mxu0 0.0
          %458 = vmatpush1.msra.mxu0 0.0
          %459 = vmatprep.subr.mxu0 0.0
          %460 = vmatpush1.msra.mxu0 0.0
          %461 = vmatprep.subr.mxu0 0.0
          %462 = vmatpush1.msra.mxu0 0.0
          %463 = vmatprep.subr.mxu0 0.0
          %464 = vmatpush1.msra.mxu0 0.0
          %465 = vmatprep.subr.mxu0 0.0
          %466 = vmatpush1.msra.mxu0 0.0
          %467 = vmatprep.subr.mxu0 0.0
          %468 = vmatpush1.msra.mxu0 0.0
          %469 = vmatprep.subr.mxu0 0.0
          %470 = vmatpush1.msra.mxu0 0.0
          %471 = vmatprep.subr.mxu0 0.0
          %472 = vmatpush1.msra.mxu0 0.0
          %473 = vmatprep.subr.mxu0 0.0
          %474 = vmatpush1.msra.mxu0 0.0
          %475 = vmatprep.subr.mxu0 0.0
          %476 = vmatpush1.msra.mxu0 0.0
          %477 = vmatprep.subr.mxu0 0.0
          %478 = vmatpush1.msra.mxu0 0.0
          %479 = vmatprep.subr.mxu0 0.0
          %480 = vmatpush1.msra.mxu0 0.0
          %481 = vmatprep.subr.mxu0 0.0
          %482 = vmatpush1.msra.mxu0 0.0
          %483 = vmatprep.subr.mxu0 0.0
          %484 = vmatpush1.msra.mxu0 0.0
          %485 = vmatprep.subr.mxu0 0.0
          %486 = vmatpush1.msra.mxu0 0.0
          %487 = vmatprep.subr.mxu0 0.0
          %488 = vmatpush1.msra.mxu0 0.0
          %489 = vmatprep.subr.mxu0 0.0
          %490 = vmatpush1.msra.mxu0 0.0
          %491 = vmatprep.subr.mxu0 0.0
          %492 = vmatpush1.msra.mxu0 0.0
          %493 = vmatprep.mubr.f32.mxu0 0.0
          %494 = vmatmul.mubr.f32.gmra.mrb[0].mxu0 %v427
          %v495 = vpop.f32.mrb[0].mxu0
          %v496 = vadd.f32 %v424, %v495
          %v497 = vpop.f32.mrb[0].mxu0
          %498 = vdwg.mxu0
          %499 = vst [vmem:[#allocation9] sm:$0x3] %v496
        $region56: #{tpu_custom_call.1} parent=35 // pred_fallthru
          _
        // Predicated region
        $region57: #{tpu_custom_call.1} parent=35 // pred_check
          %p500 = pneg %p150
        $region58: #{tpu_custom_call.1} parent=35 // pred_check_branch
          %502 = sbr.rel (%p500) target = $region60
        $region59: #{tpu_custom_call.1} parent=35 // pred_region
          %s504 = ssub.s32 32, 32
          %505 = vsyncadd [#allocation5], %s504
          %s506 = smul.addr %s26, 32
          %s507 = scalar_lea.hbm %s4, %s506
          %s509 = sshll.u32 [#allocation9], 4
          %s510 = int_to_ptr.vmem [resolvable:$true] %s509
          %512 = dma.vmem_to_hbm [thread:$0]  %s510, 32, %s507, [#allocation5]
        $region60: #{tpu_custom_call.1} parent=35 // pred_fallthru
          _
        // Predicated region
        $region61: #{tpu_custom_call.1} parent=35 // pred_check
          %p513 = pneg %p150
        $region62: #{tpu_custom_call.1} parent=35 // pred_check_branch
          %515 = sbr.rel (%p513) target = $region64
        $region63: #{tpu_custom_call.1} parent=35 // pred_region
          %516 = dma.done [#allocation5], 32
        $region64: #{tpu_custom_call.1} parent=35 // pred_fallthru
          _
      $region36: #{tpu_custom_call.1} parent=5 // pred_fallthru
        _
      %p517 = scmp.le.s32.totalorder 2, %s17
      // Predicated region
      $region65: #{tpu_custom_call.1} parent=5 // pred_check
        %p518 = pneg %p517
      $region66: #{tpu_custom_call.1} parent=5 // pred_check_branch
        %520 = sbr.rel (%p518) target = $region68
      $region67: #{tpu_custom_call.1} parent=5 // pred_region
        %s521 = ssub.s32 %s17, 2
      $region68: #{tpu_custom_call.1} parent=5 // pred_fallthru
        _
    $region6: #{tpu_custom_call.1} parent=1 // loop_footer
      %s21 = sadd.s32 1, %s17
    $region7: #{tpu_custom_call.1} parent=1 // loop_footer_branch
      %16 = sbr.rel target = $region3
    $region8: #{tpu_custom_call.1} parent=1 // loop_exit
      _
    %522 = vsyncpa [#allocation4], 1
    %s523 = scalar_lea.sflag [#allocation4], 1
    %524 = vsyncpa %s523, 1
    %525 = vsyncpa [#allocation7], 1
    %s526 = scalar_lea.sflag [#allocation7], 1
    %527 = vsyncpa %s526, 1
    %528 = vsyncpa [#allocation5], 1
    %s529 = scalar_lea.sflag [#allocation5], 1
    %530 = vsyncpa %s529, 1

// kernel: tpu_custom_call.1
$region0: #{tpu_custom_call.1}
  #allocation0 [shape = 'u32[]', space=smem, size = 0x4, offset = 0x4, fixed_abs, tag = 'smem constant byte address 0x4 - core index']
  #allocation1 [shape = 'u32[144,128]{1,0:T(1,128)}', space=vmem, size = 0x12000, scoped, tag = 'internal scratch']
  #allocation2 [shape = 'f32[2,32]{1,0:T(2,128)}', space=vmem, size = 0x400, scoped, tag = 'scratch operand']
  #allocation10 [shape = 's32[]', space=sflag, size = 0x4, offset = 0, fixed_abs, tag = 'sflag constant byte address 0x0 - dummy sync flag']
  #allocation12 [shape = 's32[]', space=sflag, size = 0x4, offset = 0, fixed_abs, tag = 'sflag constant byte address 0x0 - dummy sync flag']
  %s0 = inlined_call_operand.hbm [shape: bf16[2,32,32], index: 0, kind: input, shape index: {}]
  %s1 = inlined_call_operand.hbm [shape: bf16[2,32,32], index: 1, kind: input, shape index: {}]
  %s2 = inlined_call_operand.hbm [shape: f32[32,128], index: 2, kind: input, shape index: {}]
  %s3 = inlined_call_operand.vmem [shape: f32[1,128], index: 3, kind: input, shape index: {}]
  %s4 = inlined_call_operand.hbm [shape: f32[2,128], index: 4, kind: output, shape index: {}]
  %s5 = sld [smem:[#allocation0]]
  $region69: #{tpu_custom_call.1} parent=0
    _
  %s7 = ssub.s32 1, %s5
  %s8 = scalar_select 0, %s7, %s5
  $region1: #{tpu_custom_call.1} parent=0
    #allocation3 [shape = 'u8[16384]{0}', space=vmem, size = 0x4000, scoped, tag = 'input window, operand 0']
    #allocation4 [shape = 's32[2]{0}', space=sflag, size = 0x8, scoped, tag = 'scoped memory for tpu_custom_call.1']
    #allocation5 [shape = 's32[2]{0}', space=sflag, size = 0x8, scoped, tag = 'scoped memory for tpu_custom_call.1']
    #allocation6 [shape = 'u8[16384]{0}', space=vmem, size = 0x4000, scoped, tag = 'input window, operand 1']
    #allocation7 [shape = 's32[2]{0}', space=sflag, size = 0x8, scoped, tag = 'scoped memory for tpu_custom_call.1']
    #allocation8 [shape = 'u8[16384]{0}', space=vmem, size = 0x4000, scoped, tag = 'input window, operand 2, single buffered']
    #allocation9 [shape = 'u8[1024]{0}', space=vmem, size = 0x400, scoped, tag = 'output window, operand 0, single buffered']
    %9 = vsyncpa [#allocation4], 0
    %s10 = scalar_lea.sflag [#allocation4], 1
    %11 = vsyncpa %s10, 0
    %12 = vsyncpa [#allocation7], 0
    %s13 = scalar_lea.sflag [#allocation7], 1
    %14 = vsyncpa %s13, 0
    %15 = vsyncpa [#allocation5], 0
    loop: start=0, step=1, limit=4
    $region2: #{tpu_custom_call.1} parent=1 // loop_pre_header
      _
    $region3: #{tpu_custom_call.1} parent=1 // loop_header
      %s17 = sphi 0, %s21
      %p18 = scmp.ge.s32.totalorder %s17, 4
      %s24 = sphi 0, %s36
      %s25 = sphi 0, %s32
      %s26 = sphi 0, %s24
      %s27 = sphi 0, %s25
      %s28 = sphi 0, %s26
      %s29 = sphi 0, %s27
      %s41 = sphi 0, %s43
      %s44 = sphi 0, %s41
      %s45 = sphi 0, %s44
      %s61 = sphi 0, %s45
      %s69 = sphi 0, %s71
      %s72 = sphi 0, %s69
      %s73 = sphi 0, %s72
      %s89 = sphi 0, %s73
      %s93 = sphi 0, %s93
      %s95 = sphi 0, %s93
      %s96 = sphi 0, %s95
      %s110 = sphi 0, %s96
      %s114 = sphi 0, %s114
      %s116 = sphi 0, %s114
      %s117 = sphi 0, %s116
      %s131 = sphi 0, %s117
      %s137 = sphi 0, %s139
      %s140 = sphi 0, %s137
      %s141 = sphi 0, %s140
      %s157 = sphi 0, %s141
    $region4: #{tpu_custom_call.1} parent=1 // loop_header_branch
      %20 = sbr.rel (%p18) target = $region8
    $region5: #{tpu_custom_call.1} parent=1 // loop_body
      %s22 = ssub.s32 %s17, 1
      %s23 = ssub.s32 %s17, 2
      %s30 = sadd.s32 1, %s25
      %p31 = scmp.ge.s32.totalorder %s30, 2
      %s32 = scalar_select %p31, 0, %s30
      %s33 = sadd.s32 1, %s24
      %s34 = scalar_select %p31, %s33, %s24
      %p35 = scmp.ge.s32.totalorder %s34, 1
      %s36 = scalar_select %p35, 0, %s34
      %s37 = ssub.s32 %s24, %s36
      %s38 = ssub.s32 %s25, %s32
      %s39 = sor.u32 %s37, %s38
      %p40 = scmp.eq.s32.totalorder %s39, 0
      %s42 = sadd.s32 %s41, 1
      %s43 = scalar_select %p40, %s41, %s42
      %p46 = pneg %p40
      %p47 = scmp.eq.s32.totalorder %s17, 1
      %p48 = por %p46, %p47
      %p49 = scmp.ne.s32.totalorder %s41, %s44
      %p50 = scmp.eq.s32.totalorder %s17, 0
      %p51 = por %p49, %p50
      %p52 = scmp.ne.s32.totalorder %s41, %s44
      %p53 = scmp.eq.s32.totalorder %s22, 1
      %p54 = por %p52, %p53
      %p55 = scmp.ne.s32.totalorder %s44, %s45
      %p56 = scmp.eq.s32.totalorder %s22, 0
      %p57 = por %p55, %p56
      %p58 = scmp.ne.s32.totalorder %s44, %s45
      %p59 = scmp.eq.s32.totalorder %s23, 1
      %p60 = por %p58, %p59
      %p62 = scmp.ne.s32.totalorder %s45, %s61
      %p63 = scmp.eq.s32.totalorder %s23, 0
      %p64 = por %p62, %p63
      %s65 = ssub.s32 %s24, %s36
      %s66 = ssub.s32 %s25, %s32
      %s67 = sor.u32 %s65, %s66
      %p68 = scmp.eq.s32.totalorder %s67, 0
      %s70 = sadd.s32 %s69, 1
      %s71 = scalar_select %p68, %s69, %s70
      %p74 = pneg %p68
      %p75 = scmp.eq.s32.totalorder %s17, 1
      %p76 = por %p74, %p75
      %p77 = scmp.ne.s32.totalorder %s69, %s72
      %p78 = scmp.eq.s32.totalorder %s17, 0
      %p79 = por %p77, %p78
      %p80 = scmp.ne.s32.totalorder %s69, %s72
      %p81 = scmp.eq.s32.totalorder %s22, 1
      %p82 = por %p80, %p81
      %p83 = scmp.ne.s32.totalorder %s72, %s73
      %p84 = scmp.eq.s32.totalorder %s22, 0
      %p85 = por %p83, %p84
      %p86 = scmp.ne.s32.totalorder %s72, %s73
      %p87 = scmp.eq.s32.totalorder %s23, 1
      %p88 = por %p86, %p87
      %p90 = scmp.ne.s32.totalorder %s73, %s89
      %p91 = scmp.eq.s32.totalorder %s23, 0
      %p92 = por %p90, %p91
      %s94 = sadd.s32 %s93, 1
      %p97 = scmp.eq.s32.totalorder %s17, 1
      %p98 = scmp.ne.s32.totalorder %s93, %s95
      %p99 = scmp.eq.s32.totalorder %s17, 0
      %p100 = por %p98, %p99
      %p101 = scmp.ne.s32.totalorder %s93, %s95
      %p102 = scmp.eq.s32.totalorder %s22, 1
      %p103 = por %p101, %p102
      %p104 = scmp.ne.s32.totalorder %s95, %s96
      %p105 = scmp.eq.s32.totalorder %s22, 0
      %p106 = por %p104, %p105
      %p107 = scmp.ne.s32.totalorder %s95, %s96
      %p108 = scmp.eq.s32.totalorder %s23, 1
      %p109 = por %p107, %p108
      %p111 = scmp.ne.s32.totalorder %s96, %s110
      %p112 = scmp.eq.s32.totalorder %s23, 0
      %p113 = por %p111, %p112
      %s115 = sadd.s32 %s114, 1
      %p118 = scmp.eq.s32.totalorder %s17, 1
      %p119 = scmp.ne.s32.totalorder %s114, %s116
      %p120 = scmp.eq.s32.totalorder %s17, 0
      %p121 = por %p119, %p120
      %p122 = scmp.ne.s32.totalorder %s114, %s116
      %p123 = scmp.eq.s32.totalorder %s22, 1
      %p124 = por %p122, %p123
      %p125 = scmp.ne.s32.totalorder %s116, %s117
      %p126 = scmp.eq.s32.totalorder %s22, 0
      %p127 = por %p125, %p126
      %p128 = scmp.ne.s32.totalorder %s116, %s117
      %p129 = scmp.eq.s32.totalorder %s23, 1
      %p130 = por %p128, %p129
      %p132 = scmp.ne.s32.totalorder %s117, %s131
      %p133 = scmp.eq.s32.totalorder %s23, 0
      %p134 = por %p132, %p133
      %s135 = ssub.s32 %s24, %s36
      %p136 = scmp.eq.s32.totalorder %s135, 0
      %s138 = sadd.s32 %s137, 1
      %s139 = scalar_select %p136, %s137, %s138
      %p142 = pneg %p136
      %p143 = scmp.eq.s32.totalorder %s17, 1
      %p144 = por %p142, %p143
      %p145 = scmp.ne.s32.totalorder %s137, %s140
      %p146 = scmp.eq.s32.totalorder %s17, 0
      %p147 = por %p145, %p146
      %p148 = scmp.ne.s32.totalorder %s137, %s140
      %p149 = scmp.eq.s32.totalorder %s22, 1
      %p150 = por %p148, %p149
      %p151 = scmp.ne.s32.totalorder %s140, %s141
      %p152 = scmp.eq.s32.totalorder %s22, 0
      %p153 = por %p151, %p152
      %p154 = scmp.ne.s32.totalorder %s140, %s141
      %p155 = scmp.eq.s32.totalorder %s23, 1
      %p156 = por %p154, %p155
      %p158 = scmp.ne.s32.totalorder %s141, %s157
      %p159 = scmp.eq.s32.totalorder %s23, 0
      %p160 = por %p158, %p159
      %p161 = scmp.le.s32.totalorder 1, %s17
      %p162 = scmp.lt.s32.totalorder %s17, 3
      %p163 = pnand %p161, %p162
      %p164 = pneg %p163
      // Predicated region
      $region9: #{tpu_custom_call.1} parent=5 // pred_check
        _
      $region10: #{tpu_custom_call.1} parent=5 // pred_check_branch
        %166 = sbr.rel (%p163) target = $region12
      $region11: #{tpu_custom_call.1} parent=5 // pred_region
        %s167 = ssub.s32 %s17, 1
        // Predicated region
        $region13: #{tpu_custom_call.1} parent=11 // pred_check
          %p168 = pneg %p106
        $region14: #{tpu_custom_call.1} parent=11 // pred_check_branch
          %170 = sbr.rel (%p168) target = $region16
        $region15: #{tpu_custom_call.1} parent=11 // pred_region
          %s172 = ssub.s32 512, 512
          %173 = vsyncadd [#allocation7], %s172
          %s174 = sshll.u32 [#allocation8], 4
          %s175 = int_to_ptr.vmem [resolvable:$true] %s174
          %180 = dma.hbm_to_vmem [thread:$0]  %s2, 512, %s175, [#allocation7], 128, 128, 8
        $region16: #{tpu_custom_call.1} parent=11 // pred_fallthru
          _
        // Predicated region
        $region17: #{tpu_custom_call.1} parent=11 // pred_check
          %p181 = pneg %p127
        $region18: #{tpu_custom_call.1} parent=11 // pred_check_branch
          %183 = sbr.rel (%p181) target = $region20
        $region19: #{tpu_custom_call.1} parent=11 // pred_region
          _
        $region20: #{tpu_custom_call.1} parent=11 // pred_fallthru
          _
      $region12: #{tpu_custom_call.1} parent=5 // pred_fallthru
        _
      %p184 = scmp.lt.s32.totalorder %s17, 2
      // Predicated region
      $region21: #{tpu_custom_call.1} parent=5 // pred_check
        %p185 = pneg %p184
      $region22: #{tpu_custom_call.1} parent=5 // pred_check_branch
        %187 = sbr.rel (%p185) target = $region24
      $region23: #{tpu_custom_call.1} parent=5 // pred_region
        // Predicated region
        $region25: #{tpu_custom_call.1} parent=23 // pred_check
          %p188 = pneg %p51
        $region26: #{tpu_custom_call.1} parent=23 // pred_check_branch
          %190 = sbr.rel (%p188) target = $region28
        $region27: #{tpu_custom_call.1} parent=23 // pred_region
          #allocation11 [shape = 'u32[6]{0}', space=smem, size = 0x18, scoped, tag = 'DMA stride descriptor']
          %s191 = sand.u32 %s41, 1
          %s192 = scalar_lea.sflag [#allocation4], %s191
          %s193 = sand.u32 %s41, 1
          %s194 = smul.addr %s193, 16
          %s195 = scalar_lea.vmem [#allocation3], %s194
          %s196 = smul.u32 2, %s24
          %s197 = smul.u32 2, %s25
          %s199 = ssub.s32 256, 256
          %200 = vsyncadd %s192, %s199
          %s201 = smul.addr %s196, 4
          %s202 = sadd.s32 %s197, %s201
          %s203 = smul.addr %s202, 64
          %s204 = scalar_lea.hbm %s0, %s203
          %s206 = sshll.u32 1, 14
          %s207 = sxor.u32 4294967295, %s206
          %s209 = sld [smem:[#allocation0]]
          %s210 = sadd.s32 2, %s209
          %s212 = sshll.u32 7, 26
          %s213 = sxor.u32 4294967295, %s212
          %s214 = sand.u32 0, %s213
          %s215 = sshll.u32 %s210, 26
          %s216 = sor.u32 %s214, %s215
          %s217 = sshll.u32 %s195, 4
          %s218 = int_to_ptr.vmem [resolvable:$true] %s217
          %224 = sst [smem:[#allocation11]] 256
          %s225 = scalar_lea.smem [#allocation11], 1
          %226 = sst [smem:[%s225]] 128
          %s227 = scalar_lea.smem [#allocation11], 2
          %228 = sst [smem:[%s227]] 2
          %s229 = scalar_lea.smem [#allocation11], 3
          %230 = sst [smem:[%s229]] 64
          %s231 = scalar_lea.smem [#allocation11], 4
          %232 = sst [smem:[%s231]] 64
          %s233 = scalar_lea.smem [#allocation11], 5
          %234 = sst [smem:[%s233]] 4
          %236 = dma.general %s204, 256, %s218, %s192, [#allocation10], [#allocation11], %s216, 0
        $region28: #{tpu_custom_call.1} parent=23 // pred_fallthru
          _
        // Predicated region
        $region29: #{tpu_custom_call.1} parent=23 // pred_check
          %p237 = pneg %p79
        $region30: #{tpu_custom_call.1} parent=23 // pred_check_branch
          %239 = sbr.rel (%p237) target = $region32
        $region31: #{tpu_custom_call.1} parent=23 // pred_region
          #allocation13 [shape = 'u32[6]{0}', space=smem, size = 0x18, scoped, tag = 'DMA stride descriptor']
          %s240 = sand.u32 %s17, 1
          %s241 = scalar_lea.sflag [#allocation7], %s240
          %s242 = sand.u32 %s69, 1
          %s243 = smul.addr %s242, 16
          %s244 = scalar_lea.vmem [#allocation6], %s243
          %s245 = smul.u32 2, %s24
          %s246 = smul.u32 2, %s25
          %s248 = ssub.s32 256, 256
          %249 = vsyncadd %s241, %s248
          %s250 = smul.addr %s245, 4
          %s251 = sadd.s32 %s246, %s250
          %s252 = smul.addr %s251, 64
          %s253 = scalar_lea.hbm %s1, %s252
          %s255 = sshll.u32 1, 14
          %s256 = sxor.u32 4294967295, %s255
          %s258 = sld [smem:[#allocation0]]
          %s259 = sadd.s32 2, %s258
          %s261 = sshll.u32 7, 26
          %s262 = sxor.u32 4294967295, %s261
          %s263 = sand.u32 0, %s262
          %s264 = sshll.u32 %s259, 26
          %s265 = sor.u32 %s263, %s264
          %s266 = sshll.u32 %s244, 4
          %s267 = int_to_ptr.vmem [resolvable:$true] %s266
          %273 = sst [smem:[#allocation13]] 256
          %s274 = scalar_lea.smem [#allocation13], 1
          %275 = sst [smem:[%s274]] 128
          %s276 = scalar_lea.smem [#allocation13], 2
          %277 = sst [smem:[%s276]] 2
          %s278 = scalar_lea.smem [#allocation13], 3
          %279 = sst [smem:[%s278]] 64
          %s280 = scalar_lea.smem [#allocation13], 4
          %281 = sst [smem:[%s280]] 64
          %s282 = scalar_lea.smem [#allocation13], 5
          %283 = sst [smem:[%s282]] 4
          %285 = dma.general %s253, 256, %s267, %s241, [#allocation12], [#allocation13], %s265, 0
        $region32: #{tpu_custom_call.1} parent=23 // pred_fallthru
          _
      $region24: #{tpu_custom_call.1} parent=5 // pred_fallthru
        _
      %p286 = scmp.le.s32.totalorder 1, %s17
      %p287 = scmp.lt.s32.totalorder %s17, 3
      %p288 = pnand %p286, %p287
      %p289 = pneg %p288
      // Predicated region
      $region33: #{tpu_custom_call.1} parent=5 // pred_check
        _
      $region34: #{tpu_custom_call.1} parent=5 // pred_check_branch
        %291 = sbr.rel (%p288) target = $region36
      $region35: #{tpu_custom_call.1} parent=5 // pred_region
        %s292 = ssub.s32 %s17, 1
        %s293 = sand.u32 %s44, 1
        %s294 = scalar_lea.sflag [#allocation4], %s293
        %s295 = sand.u32 %s44, 1
        %s296 = smul.addr %s295, 16
        %s297 = scalar_lea.vmem [#allocation3], %s296
        // Predicated region
        $region37: #{tpu_custom_call.1} parent=35 // pred_check
          %p298 = pneg %p57
        $region38: #{tpu_custom_call.1} parent=35 // pred_check_branch
          %300 = sbr.rel (%p298) target = $region40
        $region39: #{tpu_custom_call.1} parent=35 // pred_region
          %301 = dma.done %s294, 256
        $region40: #{tpu_custom_call.1} parent=35 // pred_fallthru
          _
        %s302 = sand.u32 %s22, 1
        %s303 = scalar_lea.sflag [#allocation7], %s302
        %s304 = sand.u32 %s72, 1
        %s305 = smul.addr %s304, 16
        %s306 = scalar_lea.vmem [#allocation6], %s305
        // Predicated region
        $region41: #{tpu_custom_call.1} parent=35 // pred_check
          %p307 = pneg %p85
        $region42: #{tpu_custom_call.1} parent=35 // pred_check_branch
          %309 = sbr.rel (%p307) target = $region44
        $region43: #{tpu_custom_call.1} parent=35 // pred_region
          %310 = dma.done %s303, 256
        $region44: #{tpu_custom_call.1} parent=35 // pred_fallthru
          _
        // Predicated region
        $region45: #{tpu_custom_call.1} parent=35 // pred_check
          %p311 = pneg %p106
        $region46: #{tpu_custom_call.1} parent=35 // pred_check_branch
          %313 = sbr.rel (%p311) target = $region48
        $region47: #{tpu_custom_call.1} parent=35 // pred_region
          %314 = dma.done [#allocation7], 512
        $region48: #{tpu_custom_call.1} parent=35 // pred_fallthru
          _
        %s315 = sand.u32 %s44, 1
        %s316 = scalar_lea.sflag [#allocation4], %s315
        %s317 = sand.u32 %s44, 1
        %s318 = smul.addr %s317, 16
        %s319 = scalar_lea.vmem [#allocation3], %s318
        %p320 = pneg %p57
        %p321 = pneg %p54
        %s322 = sand.u32 %s22, 1
        %s323 = scalar_lea.sflag [#allocation7], %s322
        %s324 = sand.u32 %s72, 1
        %s325 = smul.addr %s324, 16
        %s326 = scalar_lea.vmem [#allocation6], %s325
        %p327 = pneg %p85
        %p328 = pneg %p82
        %p329 = pneg %p106
        %p330 = pneg %p103
        %p331 = pneg %p127
        %p332 = pneg %p124
        %p333 = pneg %p153
        %p334 = pneg %p150
        %s335 = smul.u32 2, %s26
        %s336 = smul.u32 2, %s27
        %s337 = smul.u32 2, %s26
        %s338 = smul.u32 2, %s27
        %p339 = scmp.eq.s32.totalorder %s27, 0
        // Predicated region
        $region49: #{tpu_custom_call.1} parent=35 // pred_check
          %p340 = pneg %p339
        $region50: #{tpu_custom_call.1} parent=35 // pred_check_branch
          %342 = sbr.rel (%p340) target = $region52
        $region51: #{tpu_custom_call.1} parent=35 // pred_region
          %vm343 = vcmask 254976
          %344 = vst.msk [vmem:[#allocation2] sm:$0x3] %vm343, 0.0
        $region52: #{tpu_custom_call.1} parent=35 // pred_fallthru
          _
        %v345 = vld [vmem:[#allocation2] sm:$0x3]
        %v346 = vld [vmem:[%s297] sm:$0xf]
        %v347 = vld [vmem:[%s297 + $0x4] sm:$0xf]
        %v348 = vld [vmem:[%s297 + $0x8] sm:$0xf]
        %v349 = vld [vmem:[%s297 + $0xc] sm:$0xf]
        %v350 = vunpack.c.l.bf16 %v346
        %v351 = vunpack.c.l.bf16 %v347
        %v352 = vunpack.c.l.bf16 %v348
        %v353 = vunpack.c.l.bf16 %v349
        %vm354 = vcmask 261120
        %v355 = vsel %vm354, %v350, 0.0
        %v356 = vsel %vm354, %v351, 0.0
        %v357 = vadd.f32 %v355, %v356
        %v358 = vrot.slane %v357, 4
        %v359 = vadd.f32 %v357, %v358
        %v360 = vrot.slane %v359, 2
        %v361 = vadd.f32 %v359, %v360
        %v362 = vrot.slane %v361, 1
        %v363 = vadd.f32 %v361, %v362
        %v364 = vsel %vm354, %v352, 0.0
        %v365 = vsel %vm354, %v353, 0.0
        %v366 = vadd.f32 %v364, %v365
        %v367 = vrot.slane %v366, 4
        %v368 = vadd.f32 %v366, %v367
        %v369 = vrot.slane %v368, 2
        %v370 = vadd.f32 %v368, %v369
        %v371 = vrot.slane %v370, 1
        %v372 = vadd.f32 %v370, %v371
        %v373 = vld [vmem:[%s306] sm:$0xf]
        %v374 = vld [vmem:[%s306 + $0x4] sm:$0xf]
        %v375 = vld [vmem:[%s306 + $0x8] sm:$0xf]
        %v376 = vld [vmem:[%s306 + $0xc] sm:$0xf]
        %v377 = vunpack.c.l.bf16 %v373
        %v378 = vunpack.c.l.bf16 %v374
        %v379 = vunpack.c.l.bf16 %v375
        %v380 = vunpack.c.l.bf16 %v376
        %v381 = vsel %vm354, %v377, 0.0
        %v382 = vsel %vm354, %v378, 0.0
        %v383 = vadd.f32 %v381, %v382
        %v384 = vrot.slane %v383, 4
        %v385 = vadd.f32 %v383, %v384
        %v386 = vrot.slane %v385, 2
        %v387 = vadd.f32 %v385, %v386
        %v388 = vrot.slane %v387, 1
        %v389 = vadd.f32 %v387, %v388
        %v390 = vsel %vm354, %v379, 0.0
        %v391 = vsel %vm354, %v380, 0.0
        %v392 = vadd.f32 %v390, %v391
        %v393 = vrot.slane %v392, 4
        %v394 = vadd.f32 %v392, %v393
        %v395 = vrot.slane %v394, 2
        %v396 = vadd.f32 %v394, %v395
        %v397 = vrot.slane %v396, 1
        %v398 = vadd.f32 %v396, %v397
        %v399 = vadd.f32 %v363, %v389
        %v400 = vadd.f32 %v372, %v398
        %vm403 = vcmask 1041409
        %v404 = vsel %vm403, %v400, %v399
        %v406 = vadd.f32 %v345, %v404
        %vm407 = vcmask 254976
        %408 = vst.msk [vmem:[#allocation2] sm:$0x3] %vm407, %v406
        %p409 = scmp.eq.s32.totalorder %s27, 1
        // Predicated region
        $region53: #{tpu_custom_call.1} parent=35 // pred_check
          %p410 = pneg %p409
        $region54: #{tpu_custom_call.1} parent=35 // pred_check_branch
          %412 = sbr.rel (%p410) target = $region56
        $region55: #{tpu_custom_call.1} parent=35 // pred_region
          %v413 = vld [vmem:[#allocation2] sm:$0x3]
          %v414 = vmul.f32 %v413, 0.03125
          %v415 = vld [vmem:[#allocation8] sm:$0xff]
          %v416 = vld [vmem:[#allocation8 + $0x8] sm:$0xff]
          %v417 = vld [vmem:[#allocation8 + $0x10] sm:$0xff]
          %v418 = vld [vmem:[#allocation8 + $0x18] sm:$0xff]
          %v419 = vld [vmem:[%s3] sm:$0x1]
          %v421 = vlaneseq
          %v422 = vshrl.u32 %v421, 7
          %v423 = vsub.s32 0, %v422
          %v424 = vrot.slane %v419, %v423
          %v427 = vsel %vm354, %v414, 0
          %429 = vmatprep.subr.mxu0 0.0
          %430 = vmatpush1.msra.mxu0 %v415
          %431 = vmatprep.subr.mxu0 0.0
          %432 = vmatpush1.msra.mxu0 %v416
          %433 = vmatprep.subr.mxu0 0.0
          %434 = vmatpush1.msra.mxu0 %v417
          %435 = vmatprep.subr.mxu0 0.0
          %436 = vmatpush1.msra.mxu0 %v418
          %437 = vmatprep.subr.mxu0 0.0
          %438 = vmatpush1.msra.mxu0 0.0
          %439 = vmatprep.subr.mxu0 0.0
          %440 = vmatpush1.msra.mxu0 0.0
          %441 = vmatprep.subr.mxu0 0.0
          %442 = vmatpush1.msra.mxu0 0.0
          %443 = vmatprep.subr.mxu0 0.0
          %444 = vmatpush1.msra.mxu0 0.0
          %445 = vmatprep.subr.mxu0 0.0
          %446 = vmatpush1.msra.mxu0 0.0
          %447 = vmatprep.subr.mxu0 0.0
          %448 = vmatpush1.msra.mxu0 0.0
          %449 = vmatprep.subr.mxu0 0.0
          %450 = vmatpush1.msra.mxu0 0.0
          %451 = vmatprep.subr.mxu0 0.0
          %452 = vmatpush1.msra.mxu0 0.0
          %453 = vmatprep.subr.mxu0 0.0
          %454 = vmatpush1.msra.mxu0 0.0
          %455 = vmatprep.subr.mxu0 0.0
          %456 = vmatpush1.msra.mxu0 0.0
          %457 = vmatprep.subr.mxu0 0.0
          %458 = vmatpush1.msra.mxu0 0.0
          %459 = vmatprep.subr.mxu0 0.0
          %460 = vmatpush1.msra.mxu0 0.0
          %461 = vmatprep.subr.mxu0 0.0
          %462 = vmatpush1.msra.mxu0 0.0
          %463 = vmatprep.subr.mxu0 0.0
          %464 = vmatpush1.msra.mxu0 0.0
          %465 = vmatprep.subr.mxu0 0.0
          %466 = vmatpush1.msra.mxu0 0.0
          %467 = vmatprep.subr.mxu0 0.0
          %468 = vmatpush1.msra.mxu0 0.0
          %469 = vmatprep.subr.mxu0 0.0
          %470 = vmatpush1.msra.mxu0 0.0
          %471 = vmatprep.subr.mxu0 0.0
          %472 = vmatpush1.msra.mxu0 0.0
          %473 = vmatprep.subr.mxu0 0.0
          %474 = vmatpush1.msra.mxu0 0.0
          %475 = vmatprep.subr.mxu0 0.0
          %476 = vmatpush1.msra.mxu0 0.0
          %477 = vmatprep.subr.mxu0 0.0
          %478 = vmatpush1.msra.mxu0 0.0
          %479 = vmatprep.subr.mxu0 0.0
          %480 = vmatpush1.msra.mxu0 0.0
          %481 = vmatprep.subr.mxu0 0.0
          %482 = vmatpush1.msra.mxu0 0.0
          %483 = vmatprep.subr.mxu0 0.0
          %484 = vmatpush1.msra.mxu0 0.0
          %485 = vmatprep.subr.mxu0 0.0
          %486 = vmatpush1.msra.mxu0 0.0
          %487 = vmatprep.subr.mxu0 0.0
          %488 = vmatpush1.msra.mxu0 0.0
          %489 = vmatprep.subr.mxu0 0.0
          %490 = vmatpush1.msra.mxu0 0.0
          %491 = vmatprep.subr.mxu0 0.0
          %492 = vmatpush1.msra.mxu0 0.0
          %493 = vmatprep.mubr.f32.mxu0 0.0
          %494 = vmatmul.mubr.f32.gmra.mrb[0].mxu0 %v427
          %v495 = vpop.f32.mrb[0].mxu0
          %v496 = vadd.f32 %v424, %v495
          %v497 = vpop.f32.mrb[0].mxu0
          %498 = vdwg.mxu0
          %499 = vst [vmem:[#allocation9] sm:$0x3] %v496
        $region56: #{tpu_custom_call.1} parent=35 // pred_fallthru
          _
        // Predicated region
        $region57: #{tpu_custom_call.1} parent=35 // pred_check
          %p500 = pneg %p150
        $region58: #{tpu_custom_call.1} parent=35 // pred_check_branch
          %502 = sbr.rel (%p500) target = $region60
        $region59: #{tpu_custom_call.1} parent=35 // pred_region
          %s504 = ssub.s32 32, 32
          %505 = vsyncadd [#allocation5], %s504
          %s506 = smul.addr %s26, 32
          %s507 = scalar_lea.hbm %s4, %s506
          %s509 = sshll.u32 [#allocation9], 4
          %s510 = int_to_ptr.vmem [resolvable:$true] %s509
          %512 = dma.vmem_to_hbm [thread:$0]  %s510, 32, %s507, [#allocation5]
        $region60: #{tpu_custom_call.1} parent=35 // pred_fallthru
          _
        // Predicated region
        $region61: #{tpu_custom_call.1} parent=35 // pred_check
          %p513 = pneg %p150
        $region62: #{tpu_custom_call.1} parent=35 // pred_check_branch
          %515 = sbr.rel (%p513) target = $region64
        $region63: #{tpu_custom_call.1} parent=35 // pred_region
          %516 = dma.done [#allocation5], 32
        $region64: #{tpu_custom_call.1} parent=35 // pred_fallthru
          _
      $region36: #{tpu_custom_call.1} parent=5 // pred_fallthru
        _
      %p517 = scmp.le.s32.totalorder 2, %s17
      // Predicated region
      $region65: #{tpu_custom_call.1} parent=5 // pred_check
        %p518 = pneg %p517
      $region66: #{tpu_custom_call.1} parent=5 // pred_check_branch
        %520 = sbr.rel (%p518) target = $region68
      $region67: #{tpu_custom_call.1} parent=5 // pred_region
        %s521 = ssub.s32 %s17, 2
      $region68: #{tpu_custom_call.1} parent=5 // pred_fallthru
        _
    $region6: #{tpu_custom_call.1} parent=1 // loop_footer
      %s21 = sadd.s32 1, %s17
    $region7: #{tpu_custom_call.1} parent=1 // loop_footer_branch
      %16 = sbr.rel target = $region3
    $region8: #{tpu_custom_call.1} parent=1 // loop_exit
      _
    %522 = vsyncpa [#allocation4], 1
    %s523 = scalar_lea.sflag [#allocation4], 1
    %524 = vsyncpa %s523, 1
    %525 = vsyncpa [#allocation7], 1
    %s526 = scalar_lea.sflag [#allocation7], 1
    %527 = vsyncpa %s526, 1
    %528 = vsyncpa [#allocation5], 1
    %s529 = scalar_lea.sflag [#allocation5], 1
    %530 = vsyncpa %s529, 1

</llo_original>
